<compile_context>
chip_gen: v5e
topology: v5e:2x2
jax: 0.10.0
libtpu: 0.0.40
codegen_flags: <defaults>
</compile_context>

<pallas_src>
import jax
import jax.numpy as jnp
from jax.experimental import pallas as pl
from jax.experimental.pallas import tpu as pltpu


# ---------------------------------------------------------------------------
# Kernel 1: fused  LinearBn -> ReLU -> (Dropout = id) -> LinearBn -> ReLU
# applied row-wise:  (tile_m, Din) -> (tile_m, FP)
# ---------------------------------------------------------------------------
def _mlp2_kernel(x_ref, w1_ref, b1_ref, w2_ref, b2_ref, o_ref):
    x = x_ref[...].astype(jnp.float32)                                   # (TM, Din)
    h = jnp.dot(x, w1_ref[...], preferred_element_type=jnp.float32) + b1_ref[...]
    h = jnp.maximum(h, 0.0)                                              # ReLU
    y = jnp.dot(h, w2_ref[...], preferred_element_type=jnp.float32) + b2_ref[...]
    y = jnp.maximum(y, 0.0)                                              # ReLU
    o_ref[...] = y.astype(o_ref.dtype)


def _round_up(x, m):
    return (x + m - 1) // m * m


def linear_bn_relu_x2(x2d, w1, b1, w2, b2, *, tile_m=512):
    """x2d: (M, Din) f32.  w1: (Din, FP), b1: (1, FP), w2: (FP, FP), b2: (1, FP).

    Large row tiles amortize the ~0.35us/step pipeline overhead; M is padded so any
    M works (no divisibility requirement), and the pad rows are sliced off afterwards.
    """
    M, Din = x2d.shape
    FP = w1.shape[1]
    tile_m = min(tile_m, _round_up(M, 8))        # tile_m always a multiple of 8
    Mpad = _round_up(M, tile_m)
    if Mpad != M:
        x2d = jnp.pad(x2d, ((0, Mpad - M), (0, 0)))

    out = pl.pallas_call(
        _mlp2_kernel,
        out_shape=jax.ShapeDtypeStruct((Mpad, FP), jnp.float32),
        grid_spec=pltpu.PrefetchScalarGridSpec(
            num_scalar_prefetch=0,
            grid=(Mpad // tile_m,),
            in_specs=[
                pl.BlockSpec((tile_m, Din), lambda i: (i, 0)),   # activations tile
                pl.BlockSpec((Din, FP), lambda i: (0, 0)),       # folded W1 (replicated)
                pl.BlockSpec((1, FP), lambda i: (0, 0)),         # folded b1
                pl.BlockSpec((FP, FP), lambda i: (0, 0)),        # folded W2
                pl.BlockSpec((1, FP), lambda i: (0, 0)),         # folded b2
            ],
            out_specs=pl.BlockSpec((tile_m, FP), lambda i: (i, 0)),
        ),
        compiler_params=pltpu.CompilerParams(
            dimension_semantics=("parallel",),
            vmem_limit_bytes=32 * 1024 * 1024,   # safe on v5e/v6e/v7x; tiles are small
        ),
    )(x2d, w1, b1, w2, b2)
    return out[:M]


# ---------------------------------------------------------------------------
# Kernel 2: per-batch fused gather (one-hot MXU matmul) + mixture + nei_fc MLP
# ---------------------------------------------------------------------------
def _make_neighbor_kernel(A, Nb, M, FP):
    """A = max_atom_length, Nb = max_bond_length, M = A * max_neighbors, FP = FP_size."""

    def kernel(anl_ref, bnl_ref, afp_ref, bfp_ref,
               w1a_ref, w1b_ref, w1c_ref, b1_ref, w2_ref, b2_ref, o_ref):
        anl = anl_ref[0]                                    # (M, 1) int32 atom indices
        bnl = bnl_ref[0]                                    # (M, 1) int32 bond indices
        afp = afp_ref[0].astype(jnp.float32)                # (A, FP)  atom_FP[b]
        bfp = bfp_ref[0].astype(jnp.float32)                # (Nb, FP) bond_FP[b]

        # Data-dependent gather expressed as one-hot matmul on the MXU.
        oh_a = (jax.lax.broadcasted_iota(jnp.int32, (M, A), 1) == anl).astype(jnp.float32)
        oh_b = (jax.lax.broadcasted_iota(jnp.int32, (M, Nb), 1) == bnl).astype(jnp.float32)
        a_nei = jnp.dot(oh_a, afp, preferred_element_type=jnp.float32)   # (M, FP)
        b_nei = jnp.dot(oh_b, bfp, preferred_element_type=jnp.float32)   # (M, FP)

        mix = a_nei + b_nei - a_nei * b_nei                               # mixture

        # concat([a, b, mix], -1) @ W1  ==  a @ W1a + b @ W1b + mix @ W1c
        h = (jnp.dot(a_nei, w1a_ref[...], preferred_element_type=jnp.float32)
             + jnp.dot(b_nei, w1b_ref[...], preferred_element_type=jnp.float32)
             + jnp.dot(mix, w1c_ref[...], preferred_element_type=jnp.float32)
             + b1_ref[...])
        h = jnp.maximum(h, 0.0)                                           # ReLU (Dropout=id)
        y = jnp.dot(h, w2_ref[...], preferred_element_type=jnp.float32) + b2_ref[...]
        y = jnp.maximum(y, 0.0)                                           # ReLU
        o_ref[0] = y.astype(o_ref.dtype)

    return kernel


def neighbor_fp(atom_FP, bond_FP, atom_neighbor_list, bond_neighbor_list,
                w1, b1, w2, b2):
    """atom_FP: (B, A, FP), bond_FP: (B, Nb, FP), neighbor lists: (B, A, N) int.

    w1: (3*FP, FP) folded nei-layer-1 weight, b1: (1, FP), w2: (FP, FP), b2: (1, FP).
    Returns neighbor_FP of shape (B, A, N, FP) float32.
    """
    B, A, FP = atom_FP.shape
    Nb = bond_FP.shape[1]
    N = atom_neighbor_list.shape[2]
    M = A * N

    # Free XLA reshapes: flatten neighbor lists so the kernel needs no in-kernel relayout.
    anl = atom_neighbor_list.reshape(B, M, 1).astype(jnp.int32)
    bnl = bond_neighbor_list.reshape(B, M, 1).astype(jnp.int32)
    w1a, w1b, w1c = w1[:FP], w1[FP:2 * FP], w1[2 * FP:]

    kernel = _make_neighbor_kernel(A, Nb, M, FP)
    out = pl.pallas_call(
        kernel,
        out_shape=jax.ShapeDtypeStruct((B, M, FP), jnp.float32),
        grid_spec=pltpu.PrefetchScalarGridSpec(
            num_scalar_prefetch=0,
            grid=(B,),
            in_specs=[
                pl.BlockSpec((1, M, 1), lambda b: (b, 0, 0)),     # atom neighbor ids
                pl.BlockSpec((1, M, 1), lambda b: (b, 0, 0)),     # bond neighbor ids
                pl.BlockSpec((1, A, FP), lambda b: (b, 0, 0)),    # atom_FP[b] table
                pl.BlockSpec((1, Nb, FP), lambda b: (b, 0, 0)),   # bond_FP[b] table
                pl.BlockSpec((FP, FP), lambda b: (0, 0)),         # W1a
                pl.BlockSpec((FP, FP), lambda b: (0, 0)),         # W1b
                pl.BlockSpec((FP, FP), lambda b: (0, 0)),         # W1c
                pl.BlockSpec((1, FP), lambda b: (0, 0)),          # b1
                pl.BlockSpec((FP, FP), lambda b: (0, 0)),         # W2
                pl.BlockSpec((1, FP), lambda b: (0, 0)),          # b2
            ],
            out_specs=pl.BlockSpec((1, M, FP), lambda b: (b, 0, 0)),
        ),
        compiler_params=pltpu.CompilerParams(
            dimension_semantics=("parallel",),
            vmem_limit_bytes=32 * 1024 * 1024,
        ),
    )(anl, bnl, atom_FP, bond_FP, w1a, w1b, w1c, b1, w2, b2)
    return out.reshape(B, A, N, FP)


# ---------------------------------------------------------------------------
# Top-level forward (FPInitializerNew.forward, eval semantics)
# ---------------------------------------------------------------------------
def fp_initializer_forward(atom_features, bond_features,
                           atom_neighbor_list, bond_neighbor_list, params):
    B, A, Fa = atom_features.shape
    _, Nb, Fb = bond_features.shape
    FP = params["atom_w2"].shape[1]

    atom_FP = linear_bn_relu_x2(
        atom_features.reshape(B * A, Fa).astype(jnp.float32),
        params["atom_w1"], params["atom_b1"], params["atom_w2"], params["atom_b2"],
    ).reshape(B, A, FP)

    bond_FP = linear_bn_relu_x2(
        bond_features.reshape(B * Nb, Fb).astype(jnp.float32),
        params["bond_w1"], params["bond_b1"], params["bond_w2"], params["bond_b2"],
    ).reshape(B, Nb, FP)

    neighbor_FP = neighbor_fp(
        atom_FP, bond_FP, atom_neighbor_list, bond_neighbor_list,
        params["nei_w1"], params["nei_b1"], params["nei_w2"], params["nei_b2"],
    )
    return atom_FP, neighbor_FP


# ---------------------------------------------------------------------------
# Parameter helpers (PyTorch conventions) and plain-JAX reference
# ---------------------------------------------------------------------------
def fold_linear_bn(W, b, gamma, beta, mean, var, eps=1e-6):
    """Fold eval-mode BatchNorm1d into the preceding Linear (PyTorch W is (out, in))."""
    scale = gamma / jnp.sqrt(var + eps)                     # (out,)
    w_eff = (W * scale[:, None]).T                          # (in, out)
    b_eff = (scale * (b - mean) + beta)[None, :]            # (1, out)
    return w_eff.astype(jnp.float32), b_eff.astype(jnp.float32)


def make_linear_bn_params(key, in_dim, out_dim):
    k1, k2, k3, k4, k5, k6 = jax.random.split(key, 6)
    lim = 1.0 / jnp.sqrt(in_dim)
    W = jax.random.uniform(k1, (out_dim, in_dim), minval=-lim, maxval=lim)
    b = jax.random.uniform(k2, (out_dim,), minval=-lim, maxval=lim)
    gamma = 1.0 + 0.1 * jax.random.normal(k3, (out_dim,))
    beta = 0.1 * jax.random.normal(k4, (out_dim,))
    mean = 0.1 * jax.random.normal(k5, (out_dim,))
    var = 1.0 + 0.2 * jax.random.uniform(k6, (out_dim,))
    return tuple(t.astype(jnp.float32) for t in (W, b, gamma, beta, mean, var))


def _linear_bn_eval(x, W, b, gamma, beta, mean, var, eps=1e-6):
    y = jnp.einsum("...i,oi->...o", x, W, precision=jax.lax.Precision.HIGHEST) + b
    return gamma * (y - mean) * jax.lax.rsqrt(var + eps) + beta


def _fc2_ref(x, pair):
    h = jnp.maximum(_linear_bn_eval(x, *pair[0]), 0.0)   # Dropout = identity (eval)
    return jnp.maximum(_linear_bn_eval(h, *pair[1]), 0.0)


def _reference(atom_features, bond_features, anl, bnl, raw):
    atom_FP = _fc2_ref(atom_features, raw["atom"])
    bond_FP = _fc2_ref(bond_features, raw["bond"])
    a_nei = jax.vmap(lambda fp, idx: fp[idx])(atom_FP, anl)       # (B, A, N, FP)
    b_nei = jax.vmap(lambda fp, idx: fp[idx])(bond_FP, bnl)       # (B, A, N, FP)
    mix = a_nei + b_nei - a_nei * b_nei
    nei = jnp.concatenate([a_nei, b_nei, mix], axis=-1)
    return atom_FP, _fc2_ref(nei, raw["nei"])


if __name__ == "__main__":
    # Small shapes consistent with the module's forward.
    B, A, Nb, N = 2, 16, 20, 4                 # batch, max_atoms, max_bonds, max_neighbors
    atom_feature_size, bond_feature_size, FP_size = 24, 12, 16

    key = jax.random.PRNGKey(0)
    (k_af, k_bf, k_anl, k_bnl,
     k_a1, k_a2, k_b1, k_b2, k_n1, k_n2) = jax.random.split(key, 10)

    atom_features = jax.random.normal(k_af, (B, A, atom_feature_size), dtype=jnp.float32)
    bond_features = jax.random.normal(k_bf, (B, Nb, bond_feature_size), dtype=jnp.float32)
    atom_neighbor_list = jax.random.randint(k_anl, (B, A, N), 0, A, dtype=jnp.int32)
    bond_neighbor_list = jax.random.randint(k_bnl, (B, A, N), 0, Nb, dtype=jnp.int32)

    raw = {
        "atom": (make_linear_bn_params(k_a1, atom_feature_size, FP_size),
                 make_linear_bn_params(k_a2, FP_size, FP_size)),
        "bond": (make_linear_bn_params(k_b1, bond_feature_size, FP_size),
                 make_linear_bn_params(k_b2, FP_size, FP_size)),
        "nei": (make_linear_bn_params(k_n1, 3 * FP_size, FP_size),
                make_linear_bn_params(k_n2, FP_size, FP_size)),
    }

    params = {}
    for name in ("atom", "bond", "nei"):
        w1, b1 = fold_linear_bn(*raw[name][0])
        w2, b2 = fold_linear_bn(*raw[name][1])
        params[f"{name}_w1"], params[f"{name}_b1"] = w1, b1
        params[f"{name}_w2"], params[f"{name}_b2"] = w2, b2

    atom_FP, neighbor_FP = fp_initializer_forward(
        atom_features, bond_features, atom_neighbor_list, bond_neighbor_list, params)
    atom_FP = jax.block_until_ready(atom_FP)
    neighbor_FP = jax.block_until_ready(neighbor_FP)

    ref_atom_FP, ref_neighbor_FP = _reference(
        atom_features, bond_features, atom_neighbor_list, bond_neighbor_list, raw)

    assert atom_FP.shape == (B, A, FP_size)
    assert neighbor_FP.shape == (B, A, N, FP_size)
    assert jnp.allclose(atom_FP, ref_atom_FP, atol=5e-3, rtol=5e-3), "atom_FP mismatch"
    assert jnp.allclose(neighbor_FP, ref_neighbor_FP, atol=5e-3, rtol=5e-3), "neighbor_FP mismatch"

    print("KERNEL_OK")
</pallas_src>

<mosaic_0001>
module attributes {stable_mosaic.version = 11 : i64} {
  func.func @_mlp2_kernel(%arg0: i32, %arg1: memref<32x24xf32, #tpu.memory_space<vmem>>, %arg2: memref<24x16xf32, #tpu.memory_space<vmem>>, %arg3: memref<1x16xf32, #tpu.memory_space<vmem>>, %arg4: memref<16x16xf32, #tpu.memory_space<vmem>>, %arg5: memref<1x16xf32, #tpu.memory_space<vmem>>, %arg6: memref<32x16xf32, #tpu.memory_space<vmem>>) attributes {dimension_semantics = [#tpu.dimension_semantics<parallel>], iteration_bounds = array<i64: 1>, scalar_prefetch = 0 : i64, scratch_operands = 0 : i64, tpu.core_type = #tpu.core_type<tc>, window_params = [{transform_indices = @transform_0, window_bounds = array<i64: 32, 24>}, {pipeline_mode = #tpu.pipeline_mode<synchronous>, transform_indices = @transform_1, window_bounds = array<i64: 24, 16>}, {pipeline_mode = #tpu.pipeline_mode<synchronous>, transform_indices = @transform_2, window_bounds = array<i64: 1, 16>}, {pipeline_mode = #tpu.pipeline_mode<synchronous>, transform_indices = @transform_3, window_bounds = array<i64: 16, 16>}, {pipeline_mode = #tpu.pipeline_mode<synchronous>, transform_indices = @transform_4, window_bounds = array<i64: 1, 16>}, {transform_indices = @transform_5, window_bounds = array<i64: 32, 16>}]} {
    %c0 = arith.constant 0 : index
    %c0_0 = arith.constant 0 : index
    %0 = vector.load %arg1[%c0, %c0_0] : memref<32x24xf32, #tpu.memory_space<vmem>>, vector<32x24xf32>
    %c0_1 = arith.constant 0 : index
    %c0_2 = arith.constant 0 : index
    %1 = vector.load %arg2[%c0_1, %c0_2] : memref<24x16xf32, #tpu.memory_space<vmem>>, vector<24x16xf32>
    %cst = arith.constant dense<0.000000e+00> : vector<32x16xf32>
    %2 = tpu.matmul %0, %1, %cst {dimension_numbers = #tpu.dot_dimension_numbers<[1], [0], [0], [1], [0, 0, 1, 1], [], []>} : vector<32x24xf32>, vector<24x16xf32>, vector<32x16xf32> -> vector<32x16xf32>
    %c0_3 = arith.constant 0 : index
    %c0_4 = arith.constant 0 : index
    %3 = vector.load %arg3[%c0_3, %c0_4] : memref<1x16xf32, #tpu.memory_space<vmem>>, vector<1x16xf32>
    %4 = vector.broadcast %3 : vector<1x16xf32> to vector<32x16xf32>
    %5 = arith.addf %2, %4 : vector<32x16xf32>
    %cst_5 = arith.constant 0.000000e+00 : f32
    %6 = vector.broadcast %cst_5 : f32 to vector<32x16xf32>
    %7 = arith.maximumf %5, %6 : vector<32x16xf32>
    %c0_6 = arith.constant 0 : index
    %c0_7 = arith.constant 0 : index
    %8 = vector.load %arg4[%c0_6, %c0_7] : memref<16x16xf32, #tpu.memory_space<vmem>>, vector<16x16xf32>
    %cst_8 = arith.constant dense<0.000000e+00> : vector<32x16xf32>
    %9 = tpu.matmul %7, %8, %cst_8 {dimension_numbers = #tpu.dot_dimension_numbers<[1], [0], [0], [1], [0, 0, 1, 1], [], []>} : vector<32x16xf32>, vector<16x16xf32>, vector<32x16xf32> -> vector<32x16xf32>
    %c0_9 = arith.constant 0 : index
    %c0_10 = arith.constant 0 : index
    %10 = vector.load %arg5[%c0_9, %c0_10] : memref<1x16xf32, #tpu.memory_space<vmem>>, vector<1x16xf32>
    %11 = vector.broadcast %10 : vector<1x16xf32> to vector<32x16xf32>
    %12 = arith.addf %9, %11 : vector<32x16xf32>
    %cst_11 = arith.constant 0.000000e+00 : f32
    %13 = vector.broadcast %cst_11 : f32 to vector<32x16xf32>
    %14 = arith.maximumf %12, %13 : vector<32x16xf32>
    %c0_12 = arith.constant 0 : index
    %c0_13 = arith.constant 0 : index
    %15 = vector.load %arg6[%c0_12, %c0_13] : memref<32x16xf32, #tpu.memory_space<vmem>>, vector<32x16xf32>
    tpu.vector_store %arg6[%c0_12, %c0_13], %14 {strides = array<i32>} : memref<32x16xf32, #tpu.memory_space<vmem>>, vector<32x16xf32>,
    return
  }
  func.func @transform_0(%arg0: i32) -> (i32, i32) {
    %c0_i32 = arith.constant 0 : i32
    %c0_i32_0 = arith.constant 0 : i32
    return %arg0, %c0_i32 : i32, i32
  }
  func.func @transform_1(%arg0: i32) -> (i32, i32) {
    %c0_i32 = arith.constant 0 : i32
    %c0_i32_0 = arith.constant 0 : i32
    %c0_i32_1 = arith.constant 0 : i32
    return %c0_i32, %c0_i32_0 : i32, i32
  }
  func.func @transform_2(%arg0: i32) -> (i32, i32) {
    %c0_i32 = arith.constant 0 : i32
    %c0_i32_0 = arith.constant 0 : i32
    %c0_i32_1 = arith.constant 0 : i32
    return %c0_i32, %c0_i32_0 : i32, i32
  }
  func.func @transform_3(%arg0: i32) -> (i32, i32) {
    %c0_i32 = arith.constant 0 : i32
    %c0_i32_0 = arith.constant 0 : i32
    %c0_i32_1 = arith.constant 0 : i32
    return %c0_i32, %c0_i32_0 : i32, i32
  }
  func.func @transform_4(%arg0: i32) -> (i32, i32) {
    %c0_i32 = arith.constant 0 : i32
    %c0_i32_0 = arith.constant 0 : i32
    %c0_i32_1 = arith.constant 0 : i32
    return %c0_i32, %c0_i32_0 : i32, i32
  }
  func.func @transform_5(%arg0: i32) -> (i32, i32) {
    %c0_i32 = arith.constant 0 : i32
    %c0_i32_0 = arith.constant 0 : i32
    return %arg0, %c0_i32 : i32, i32
  }
}

</mosaic_0001>

<llo_original>
// kernel: tpu_custom_call.1
$region0: #{tpu_custom_call.1}
  #allocation0 [shape = 'u32[]', space=smem, size = 0x4, offset = 0x4, fixed_abs, tag = 'smem constant byte address 0x4 - core index']
  #allocation1 [shape = 'u32[72,128]{1,0:T(1,128)}', space=vmem, size = 0x9000, scoped, tag = 'internal scratch']
  %s0 = inlined_call_operand.vmem [shape: f32[32,24], index: 0, kind: input, shape index: {}]
  %s1 = inlined_call_operand.vmem [shape: f32[24,16], index: 1, kind: input, shape index: {}]
  %s2 = inlined_call_operand.vmem [shape: f32[1,16], index: 2, kind: input, shape index: {}]
  %s3 = inlined_call_operand.vmem [shape: f32[16,16], index: 3, kind: input, shape index: {}]
  %s4 = inlined_call_operand.vmem [shape: f32[1,16], index: 4, kind: input, shape index: {}]
  %s5 = inlined_call_operand.vmem [shape: f32[32,16], index: 5, kind: output, shape index: {}]
  %s6 = sld [smem:[#allocation0]]
  $region30: #{tpu_custom_call.1} parent=0
    _
  %s8 = ssub.s32 1, %s6
  %s9 = scalar_select 0, %s8, %s6
  // Predicated region
  $region2: #{tpu_custom_call.1} parent=0 // pred_check
    _
  $region3: #{tpu_custom_call.1} parent=0 // pred_check_branch
    %11 = sbr.rel (0) target = $region5
  $region4: #{tpu_custom_call.1} parent=0 // pred_region
    _
  $region5: #{tpu_custom_call.1} parent=0 // pred_fallthru
    _
  // Predicated region
  $region6: #{tpu_custom_call.1} parent=0 // pred_check
    _
  $region7: #{tpu_custom_call.1} parent=0 // pred_check_branch
    %13 = sbr.rel (0) target = $region9
  $region8: #{tpu_custom_call.1} parent=0 // pred_region
    _
  $region9: #{tpu_custom_call.1} parent=0 // pred_fallthru
    _
  // Predicated region
  $region10: #{tpu_custom_call.1} parent=0 // pred_check
    _
  $region11: #{tpu_custom_call.1} parent=0 // pred_check_branch
    %15 = sbr.rel (0) target = $region13
  $region12: #{tpu_custom_call.1} parent=0 // pred_region
    _
  $region13: #{tpu_custom_call.1} parent=0 // pred_fallthru
    _
  // Predicated region
  $region14: #{tpu_custom_call.1} parent=0 // pred_check
    _
  $region15: #{tpu_custom_call.1} parent=0 // pred_check_branch
    %17 = sbr.rel (0) target = $region17
  $region16: #{tpu_custom_call.1} parent=0 // pred_region
    _
  $region17: #{tpu_custom_call.1} parent=0 // pred_fallthru
    _
  // Predicated region
  $region18: #{tpu_custom_call.1} parent=0 // pred_check
    _
  $region19: #{tpu_custom_call.1} parent=0 // pred_check_branch
    %19 = sbr.rel (0) target = $region21
  $region20: #{tpu_custom_call.1} parent=0 // pred_region
    _
  $region21: #{tpu_custom_call.1} parent=0 // pred_fallthru
    _
  %v20 = vld [vmem:[%s0] sm:$0xff]
  %v21 = vld [vmem:[%s0 + $0x8] sm:$0xff]
  %v22 = vld [vmem:[%s0 + $0x10] sm:$0xff]
  %v23 = vld [vmem:[%s0 + $0x18] sm:$0xff]
  %v24 = vld [vmem:[%s1] sm:$0xff]
  %v25 = vld [vmem:[%s1 + $0x8] sm:$0xff]
  %v26 = vld [vmem:[%s1 + $0x10] sm:$0xff]
  %v27 = vld [vmem:[%s2] sm:$0x1]
  %v29 = vperm.slane %v27, 0
  %vm31 = vcmask 195584
  %v33 = vsel %vm31, %v20, 0
  %v36 = vsel %vm31, %v21, 0
  %v39 = vsel %vm31, %v22, 0
  %v42 = vsel %vm31, %v23, 0
  %44 = vmatpush.msra.mxu0 0.0
  %45 = vmatpush.msra.mxu0 0.0
  %46 = vmatpush.msra.mxu0 0.0
  %47 = vmatpush.msra.mxu0 0.0
  %48 = vmatpush.msra.mxu0 0.0
  %49 = vmatpush.msra.mxu0 0.0
  %50 = vmatpush.msra.mxu0 0.0
  %51 = vmatpush.msra.mxu0 0.0
  %52 = vmatpush.msra.mxu0 0.0
  %53 = vmatpush.msra.mxu0 0.0
  %54 = vmatpush.msra.mxu0 0.0
  %55 = vmatpush.msra.mxu0 0.0
  %56 = vmatpush.msra.mxu0 0.0
  %57 = vmatpush.msra.mxu0 %v26
  %58 = vmatpush.msra.mxu0 %v25
  %59 = vmatpush.msra.mxu0 %v24
  %60 = vmatmul.f32.gmra.mxu0 %v33
  %v61 = vpop.f32.mrf.mxu0
  %v62 = vadd.f32 %v29, %v61
  %63 = vmatmul.f32.gmra.mxu0 %v36
  %v64 = vpop.f32.mrf.mxu0
  %v65 = vadd.f32 %v29, %v64
  %66 = vmatmul.f32.gmra.mxu0 %v39
  %v67 = vpop.f32.mrf.mxu0
  %v68 = vadd.f32 %v29, %v67
  %69 = vmatmul.f32.gmra.mxu0 %v42
  %v70 = vpop.f32.mrf.mxu0
  %v71 = vadd.f32 %v29, %v70
  %72 = vdwg.mxu0
  %v73 = vmax.f32 %v62, 0.0
  %v74 = vmax.f32 %v65, 0.0
  %v75 = vmax.f32 %v68, 0.0
  %v76 = vmax.f32 %v71, 0.0
  %v77 = vld [vmem:[%s3] sm:$0xff]
  %v78 = vld [vmem:[%s3 + $0x8] sm:$0xff]
  %v79 = vld [vmem:[%s4] sm:$0x1]
  %v81 = vperm.slane %v79, 0
  %vm83 = vcmask 130048
  %v85 = vsel %vm83, %v73, 0
  %v88 = vsel %vm83, %v74, 0
  %v91 = vsel %vm83, %v75, 0
  %v94 = vsel %vm83, %v76, 0
  %96 = vmatpush.msra.mxu0 0.0
  %97 = vmatpush.msra.mxu0 0.0
  %98 = vmatpush.msra.mxu0 0.0
  %99 = vmatpush.msra.mxu0 0.0
  %100 = vmatpush.msra.mxu0 0.0
  %101 = vmatpush.msra.mxu0 0.0
  %102 = vmatpush.msra.mxu0 0.0
  %103 = vmatpush.msra.mxu0 0.0
  %104 = vmatpush.msra.mxu0 0.0
  %105 = vmatpush.msra.mxu0 0.0
  %106 = vmatpush.msra.mxu0 0.0
  %107 = vmatpush.msra.mxu0 0.0
  %108 = vmatpush.msra.mxu0 0.0
  %109 = vmatpush.msra.mxu0 0.0
  %110 = vmatpush.msra.mxu0 %v78
  %111 = vmatpush.msra.mxu0 %v77
  %112 = vmatmul.f32.gmra.mxu0 %v85
  %v113 = vpop.f32.mrf.mxu0
  %v114 = vadd.f32 %v81, %v113
  %115 = vmatmul.f32.gmra.mxu0 %v88
  %v116 = vpop.f32.mrf.mxu0
  %v117 = vadd.f32 %v81, %v116
  %118 = vmatmul.f32.gmra.mxu0 %v91
  %v119 = vpop.f32.mrf.mxu0
  %v120 = vadd.f32 %v81, %v119
  %121 = vmatmul.f32.gmra.mxu0 %v94
  %v122 = vpop.f32.mrf.mxu0
  %v123 = vadd.f32 %v81, %v122
  %124 = vdwg.mxu0
  %v125 = vmax.f32 %v114, 0.0
  %v126 = vmax.f32 %v117, 0.0
  %v127 = vmax.f32 %v120, 0.0
  %v128 = vmax.f32 %v123, 0.0
  %129 = vst.msk [vmem:[%s5] sm:$0xff] %vm83, %v125
  %130 = vst.msk [vmem:[%s5 + $0x8] sm:$0xff] %vm83, %v126
  %131 = vst.msk [vmem:[%s5 + $0x10] sm:$0xff] %vm83, %v127
  %132 = vst.msk [vmem:[%s5 + $0x18] sm:$0xff] %vm83, %v128
  // Predicated region
  $region22: #{tpu_custom_call.1} parent=0 // pred_check
    _
  $region23: #{tpu_custom_call.1} parent=0 // pred_check_branch
    %134 = sbr.rel (0) target = $region25
  $region24: #{tpu_custom_call.1} parent=0 // pred_region
    _
  $region25: #{tpu_custom_call.1} parent=0 // pred_fallthru
    _
  // Predicated region
  $region26: #{tpu_custom_call.1} parent=0 // pred_check
    _
  $region27: #{tpu_custom_call.1} parent=0 // pred_check_branch
    %136 = sbr.rel (0) target = $region29
  $region28: #{tpu_custom_call.1} parent=0 // pred_region
    _
  $region29: #{tpu_custom_call.1} parent=0 // pred_fallthru
    _

</llo_original>
